<compile_context>
chip_gen: v6e
topology: v6e:2x2x1
jax: 0.10.0
libtpu: 0.0.40
codegen_flags: <defaults>
</compile_context>

<pallas_src>
import functools
import math

import jax
import jax.numpy as jnp
from jax import lax
from jax.experimental import pallas as pl
from jax.experimental.pallas import tpu as pltpu


_DEFAULT_BUDGET = 8 * 1024 * 1024  # total resident-VMEM target (all gens safe)


def make_dict(regret, percent_arms_correct):
    return {"regret": regret, "percent_arms_correct": percent_arms_correct}


# ---------------------------------------------------------------------------
# helpers: rounding, packing factor, tile selection, VMEM accounting
# ---------------------------------------------------------------------------
def _cdiv(a, b):
    return -(-a // b)


def _round_up(x, m):
    return (x + m - 1) // m * m


def _round_down(x, m):
    return (x // m) * m


def _sublane_tile(itemsize):
    # packed sublane tile: 8 rows for 4-byte, 16 for 2-byte, 32 for 1-byte
    return {4: 8, 2: 16, 1: 32}.get(int(itemsize), 8)


def _packing_factor(minor, batch, cap=32768):
    """G such that [B, minor] -> [B//G, G*minor] is lane-dense (G*minor % 128 == 0)."""
    if minor % 128 == 0:
        return 1
    g = 128 // math.gcd(minor, 128)
    if batch % g != 0 or g * minor > cap:
        return 1  # fall back to the (lane-padded) unpacked layout
    return g


def _choose_tiles(rows, width, dtype, tile_budget_bytes):
    """Pick (tb, t_lanes) for a [rows, width] operand so one padded tile is
    close to tile_budget_bytes.  Lanes are kept at full width whenever they
    fit (big tiles amortize the ~0.35us per-grid-step overhead)."""
    isz = jnp.dtype(dtype).itemsize
    sub = _sublane_tile(isz)
    w_pad = _round_up(width, 128)

    if rows <= sub:
        tb = rows  # full extent in the sublane dim -> always a legal block
    else:
        cap = max(sub, _round_down(rows, sub))
        want = _round_down(tile_budget_bytes // (w_pad * isz), sub)
        tb = int(min(cap, max(sub, want)))

    if width <= 128 or _round_up(tb, sub) * w_pad * isz <= tile_budget_bytes:
        return tb, width

    # lane-tiled fallback: minimal rows, multiple-of-128 lane tile
    tb = rows if rows <= sub else sub
    rows_pad = _round_up(tb, sub)
    t_lanes = _round_down(tile_budget_bytes // (rows_pad * isz), 128)
    t_lanes = int(min(max(t_lanes, 128), w_pad))
    if width % 128 == 0:  # prefer a divisor of width -> no partial lane block
        d = t_lanes
        while d > 128 and width % d:
            d -= 128
        t_lanes = d
    return tb, min(t_lanes, width)


def _tile_bytes(tb, t_lanes, itemsize):
    sub = _sublane_tile(itemsize)
    return _round_up(tb, sub) * _round_up(t_lanes, 128) * itemsize


def _vmem_limit(est_bytes):
    # honest estimate + headroom; floor 16 MiB (<= every gen's scoped default),
    # cap 32 MiB (safe even on v7x's 64 MiB physical VMEM per TC).
    return int(min(32 * 2**20, max(16 * 2**20, 2 * est_bytes)))


# ---------------------------------------------------------------------------
# Path 1: true_rewards is None
#   torch.mean(fantasy_rewards[:, :, :, 0], dim=0, keepdim=True) -> [1, N, A]
#
# Kernel: column sums of the (packed) [Bp, W] view, B reduction innermost,
# persistent f32 accumulator, optional 2-way split of the reduction across a
# leading "parallel" axis (v7x megacore).
# ---------------------------------------------------------------------------
def _colsum_kernel(x_ref, o_ref, acc_ref, *, n_rows, nb_per_split):
    s = pl.program_id(0)          # split (megacore) index
    b = pl.program_id(2)          # reduction step (innermost)

    @pl.when(b == 0)
    def _():
        acc_ref[...] = jnp.zeros_like(acc_ref)

    tb = x_ref.shape[0]
    row0 = (s * nb_per_split + b) * tb
    # row-validity mask (cdiv remainder) folded into the ones row of an MXU
    # matmul -> the sublane reduce runs on the otherwise-idle MXU.
    rid = lax.broadcasted_iota(jnp.int32, (1, tb), 1) + row0
    ones = (rid < n_rows).astype(jnp.float32)
    acc_ref[...] += jnp.dot(ones, x_ref[...].astype(jnp.float32),
                            preferred_element_type=jnp.float32)

    @pl.when(b == pl.num_programs(2) - 1)
    def _():
        o_ref[...] = acc_ref[...]


def fantasy_mean(fantasy_rewards, budget_bytes=_DEFAULT_BUDGET):
    # fantasy_rewards: [B, N, A, D] (num_sims, n_contexts, n_arms, feat)
    B, N, A, D = fantasy_rewards.shape
    NAD = N * A * D
    dt = fantasy_rewards.dtype

    g = _packing_factor(NAD, B)
    Bp, W = B // g, g * NAD
    x = fantasy_rewards.reshape(Bp, W)  # contiguous minor-dim merge: free

    per_tile = max(budget_bytes // 2, 4096)  # one input stream, double-buffered
    tb, t_lanes = _choose_tiles(Bp, W, dt, per_tile)
    n_lane = _cdiv(W, t_lanes)
    n_b = _cdiv(Bp, tb)

    # 2-way split of the B reduction (one half per v7x TensorCore).  Only when
    # the lane axis is a single (lane-dense) tile and the row-tile count is even.
    n_split = 2 if (n_lane == 1 and n_b >= 2 and n_b % 2 == 0
                    and W % 128 == 0) else 1
    if n_split == 2:
        n_b //= 2

    isz = jnp.dtype(dt).itemsize
    est = 2 * _tile_bytes(tb, t_lanes, isz) + 2 * 8 * _round_up(t_lanes, 128) * 4

    sums = pl.pallas_call(
        functools.partial(_colsum_kernel, n_rows=Bp, nb_per_split=n_b),
        out_shape=jax.ShapeDtypeStruct((1, n_split * W), jnp.float32),
        grid=(n_split, n_lane, n_b),
        in_specs=[pl.BlockSpec((tb, t_lanes),
                               lambda s, l, b, nb=n_b: (s * nb + b, l))],
        out_specs=pl.BlockSpec((1, t_lanes),
                               lambda s, l, b, nl=n_lane: (0, s * nl + l)),
        scratch_shapes=[pltpu.VMEM((1, t_lanes), jnp.float32)],
        compiler_params=pltpu.CompilerParams(
            dimension_semantics=("parallel", "parallel", "arbitrary"),
            vmem_limit_bytes=_vmem_limit(est)),
    )(x)

    # Tiny XLA glue on <= a few KB: combine splits, fold packing segments,
    # scale by 1/B and keep feature 0.
    total = sums.reshape(n_split, W).sum(axis=0) if n_split > 1 else sums[0]
    if g > 1:
        total = total.reshape(g, NAD).sum(axis=0)
    means = (total * (1.0 / B)).reshape(N, A, D)[:, :, 0]
    return means[None, :, :].astype(dt)


# ---------------------------------------------------------------------------
# Path 2: true_rewards given
#   fake_means = mean(fantasy[:, :, 0], dim=0)   -> [A]
#   true_means = mean(true[:, :, 0], dim=0)      -> [A]
#   policy = argmax(fake_means)
#   regret = max(true_means) - true_means[policy]
#   correct = (argmax(true_means) == policy)
# ---------------------------------------------------------------------------
def _regret_kernel(f_ref, t_ref, sel_ref, regret_ref, correct_ref,
                   facc_ref, tacc_ref, *, inv_b, n_rows):
    b = pl.program_id(0)

    @pl.when(b == 0)
    def _():
        facc_ref[...] = jnp.zeros_like(facc_ref)
        tacc_ref[...] = jnp.zeros_like(tacc_ref)

    tb = f_ref.shape[0]
    row0 = b * tb
    rid = lax.broadcasted_iota(jnp.int32, (1, tb), 1) + row0
    ones = (rid < n_rows).astype(jnp.float32)
    xf = f_ref[...].astype(jnp.float32)
    xt = t_ref[...].astype(jnp.float32)
    facc_ref[...] += jnp.dot(ones, xf, preferred_element_type=jnp.float32)
    tacc_ref[...] += jnp.dot(ones, xt, preferred_element_type=jnp.float32)

    @pl.when(b == pl.num_programs(0) - 1)
    def _():
        sel = sel_ref[...]                       # (W, A): fold segments + pick feat 0
        fm = jnp.dot(facc_ref[...], sel, preferred_element_type=jnp.float32) * inv_b
        tm = jnp.dot(tacc_ref[...], sel, preferred_element_type=jnp.float32) * inv_b
        a = fm.shape[1]
        arm = lax.broadcasted_iota(jnp.int32, (1, a), 1)
        fm_max = jnp.max(fm)
        tm_max = jnp.max(tm)
        sent = jnp.int32(a)
        # first index attaining the max (matches torch.argmax tie behaviour)
        policy = jnp.min(jnp.where(fm == fm_max, arm, sent))
        true_best = jnp.min(jnp.where(tm == tm_max, arm, sent))
        tm_at_policy = jnp.sum(jnp.where(arm == policy, tm, jnp.float32(0.0)))
        regret_ref[0, 0] = tm_max - tm_at_policy
        correct_ref[0, 0] = (true_best == policy).astype(jnp.int32)


def regret_eval(fantasy_rewards, true_rewards,
                budget_bytes=_DEFAULT_BUDGET, host_scalars=True):
    # fantasy_rewards, true_rewards: [B, A, D]
    B, A, D = fantasy_rewards.shape
    AD = A * D

    g = _packing_factor(AD, B, cap=4096)
    Bp, W = B // g, g * AD
    f = fantasy_rewards.reshape(Bp, W)   # free contiguous reshapes
    t = true_rewards.reshape(Bp, W)

    # Fold+feature-0 selection matrix S[w, a] = 1 iff packed column w is
    # (arm a, feature 0) in some segment.  Built here (tiny, one-shot) so the
    # kernel never needs vector integer div/mod.
    w_idx = jnp.arange(W, dtype=jnp.int32)[:, None]
    a_idx = jnp.arange(A, dtype=jnp.int32)[None, :]
    sel = ((w_idx % AD) == a_idx * D).astype(jnp.float32)

    per_tile = max(budget_bytes // 4, 4096)  # two input streams, double-buffered
    tb, _ = _choose_tiles(Bp, W, f.dtype, per_tile)
    # finalize needs the full (small) width resident in one lane tile.
    # TODO(synk): lane-tile + second fold pass if A*D ever gets huge.
    n_b = _cdiv(Bp, tb)

    isz = jnp.dtype(f.dtype).itemsize
    est = (4 * _tile_bytes(tb, W, isz)            # 2 inputs x double buffer
           + 2 * _tile_bytes(W, A, 4)             # sel (double-buffered)
           + 2 * 8 * _round_up(W, 128) * 4)       # f32 accumulators

    regret, correct = pl.pallas_call(
        functools.partial(_regret_kernel, inv_b=1.0 / B, n_rows=Bp),
        out_shape=(
            jax.ShapeDtypeStruct((1, 1), jnp.float32),
            jax.ShapeDtypeStruct((1, 1), jnp.int32),
        ),
        grid=(n_b,),
        in_specs=[
            pl.BlockSpec((tb, W), lambda b: (b, 0)),
            pl.BlockSpec((tb, W), lambda b: (b, 0)),
            pl.BlockSpec((W, A), lambda b: (0, 0)),
        ],
        out_specs=(
            pl.BlockSpec((1, 1), lambda b: (0, 0),
                         memory_space=pltpu.MemorySpace.SMEM),
            pl.BlockSpec((1, 1), lambda b: (0, 0),
                         memory_space=pltpu.MemorySpace.SMEM),
        ),
        scratch_shapes=[
            pltpu.VMEM((1, W), jnp.float32),
            pltpu.VMEM((1, W), jnp.float32),
        ],
        compiler_params=pltpu.CompilerParams(
            dimension_semantics=("arbitrary",),
            vmem_limit_bytes=_vmem_limit(est)),
    )(f, t, sel)

    # TODO(synk): the per-call D2H sync below dominates Path-2 wall clock;
    # callers that can stay on device should pass host_scalars=False (and/or
    # batch many (fantasy, true) pairs per pallas_call).
    if host_scalars:
        return make_dict(float(regret[0, 0]), int(correct[0, 0]))
    return make_dict(regret[0, 0], correct[0, 0])


def contextual_best_arm_forward(fantasy_rewards, true_rewards=None):
    if true_rewards is None:
        return fantasy_mean(fantasy_rewards)
    return regret_eval(fantasy_rewards, true_rewards)


if __name__ == "__main__":
    key = jax.random.PRNGKey(0)
    ks = jax.random.split(key, 10)

    # ---- Path 1 (no true_rewards): mean over sims of feature 0 -> [1, N, A]
    # (a) small B; B not divisible by the packing group -> lane-padded fallback
    x_a = jax.random.normal(ks[0], (4, 2, 8, 3), dtype=jnp.float32)
    out_a = jax.block_until_ready(contextual_best_arm_forward(x_a))
    ref_a = jnp.mean(x_a[:, :, :, 0], axis=0, keepdims=True)
    assert out_a.shape == (1, 2, 8)
    assert jnp.allclose(out_a, ref_a, atol=1e-5), "path-1 (a) mismatch"

    # (b) packed layout + 2-way split + multi-step reduction (forced by budget)
    x_b = jax.random.normal(ks[1], (256, 2, 8, 3), dtype=jnp.float32)
    out_b = jax.block_until_ready(fantasy_mean(x_b, budget_bytes=24576))
    ref_b = jnp.mean(x_b[:, :, :, 0], axis=0, keepdims=True)
    assert jnp.allclose(out_b, ref_b, atol=1e-4), "path-1 (b) mismatch"

    # (c) packed layout, odd number of row tiles -> no split, 3-step accumulate
    x_c = jax.random.normal(ks[2], (192, 2, 8, 3), dtype=jnp.float32)
    out_c = jax.block_until_ready(fantasy_mean(x_c, budget_bytes=24576))
    ref_c = jnp.mean(x_c[:, :, :, 0], axis=0, keepdims=True)
    assert jnp.allclose(out_c, ref_c, atol=1e-4), "path-1 (c) mismatch"

    # (d) already lane-dense (NAD % 128 == 0), forced multi-lane-tile grid
    x_d = jax.random.normal(ks[3], (16, 4, 16, 4), dtype=jnp.float32)
    out_d = jax.block_until_ready(fantasy_mean(x_d, budget_bytes=8192))
    ref_d = jnp.mean(x_d[:, :, :, 0], axis=0, keepdims=True)
    assert jnp.allclose(out_d, ref_d, atol=1e-5), "path-1 (d) mismatch"

    # (e) bf16 input: dtype cast fused into the kernel, f32 accumulation
    x_e = jax.random.normal(ks[4], (64, 2, 8, 3), dtype=jnp.bfloat16)
    out_e = jax.block_until_ready(fantasy_mean(x_e))
    ref_e = jnp.mean(x_e[:, :, :, 0].astype(jnp.float32), axis=0, keepdims=True)
    assert out_e.dtype == jnp.bfloat16
    assert jnp.allclose(out_e.astype(jnp.float32), ref_e, atol=3e-2), \
        "path-1 (e) mismatch"

    # ---- Path 2 (true_rewards given): regret + best-arm-correct scalars
    def _regret_ref(fv, tv):
        fm = jnp.mean(fv[:, :, 0].astype(jnp.float32), axis=0)
        tm = jnp.mean(tv[:, :, 0].astype(jnp.float32), axis=0)
        pol = int(jnp.argmax(fm))
        return float(jnp.max(tm) - tm[pol]), int(int(jnp.argmax(tm)) == pol)

    f_a = jax.random.normal(ks[5], (4, 8, 3), dtype=jnp.float32)
    t_a = jax.random.normal(ks[6], (4, 8, 3), dtype=jnp.float32)
    res_a = contextual_best_arm_forward(f_a, t_a)          # unpacked, 1 step
    rr, cc = _regret_ref(f_a, t_a)
    assert abs(res_a["regret"] - rr) < 1e-5, "path-2 (a) regret mismatch"
    assert res_a["percent_arms_correct"] == cc, "path-2 (a) correct mismatch"

    f_b = jax.random.normal(ks[7], (32, 8, 3), dtype=jnp.float32)
    t_b = jax.random.normal(ks[8], (32, 8, 3), dtype=jnp.float32)
    res_b = regret_eval(f_b, t_b)                           # packed, 1 step
    rr, cc = _regret_ref(f_b, t_b)
    assert abs(res_b["regret"] - rr) < 1e-5, "path-2 (b) regret mismatch"
    assert res_b["percent_arms_correct"] == cc, "path-2 (b) correct mismatch"

    f_c = jax.random.normal(ks[9], (256, 8, 3), dtype=jnp.float32)
    t_c = jax.random.normal(jax.random.PRNGKey(1), (256, 8, 3), dtype=jnp.float32)
    res_c = regret_eval(f_c, t_c, budget_bytes=49152)       # packed, 2 steps
    rr, cc = _regret_ref(f_c, t_c)
    assert abs(res_c["regret"] - rr) < 1e-4, "path-2 (c) regret mismatch"
    assert res_c["percent_arms_correct"] == cc, "path-2 (c) correct mismatch"

    print("KERNEL_OK")
</pallas_src>

<mosaic_0001>
module attributes {stable_mosaic.version = 11 : i64} {
  func.func @_colsum_kernel(%arg0: i32, %arg1: i32, %arg2: i32, %arg3: memref<4x48xf32, #tpu.memory_space<vmem>>, %arg4: memref<1x48xf32, #tpu.memory_space<vmem>>, %arg5: memref<1x48xf32, #tpu.memory_space<vmem>>) attributes {dimension_semantics = [#tpu.dimension_semantics<parallel>, #tpu.dimension_semantics<parallel>, #tpu.dimension_semantics<arbitrary>], iteration_bounds = array<i64: 1, 1, 1>, scalar_prefetch = 0 : i64, scratch_operands = 1 : i64, tpu.core_type = #tpu.core_type<tc>, window_params = [{transform_indices = @transform_0, window_bounds = array<i64: 4, 48>}, {transform_indices = @transform_1, window_bounds = array<i64: 1, 48>}]} {
    %c0_i32 = arith.constant 0 : i32
    %0 = arith.cmpi eq, %arg2, %c0_i32 : i32
    %1 = arith.extui %0 : i1 to i32
    %c0_i32_0 = arith.constant 0 : i32
    %2 = arith.cmpi ne, %1, %c0_i32_0 : i32
    scf.if %2 {
      %cst_9 = arith.constant 0.000000e+00 : f32
      %21 = vector.broadcast %cst_9 : f32 to vector<1x48xf32>
      %c0_10 = arith.constant 0 : index
      %c0_11 = arith.constant 0 : index
      %22 = vector.load %arg5[%c0_10, %c0_11] : memref<1x48xf32, #tpu.memory_space<vmem>>, vector<1x48xf32>
      tpu.vector_store %arg5[%c0_10, %c0_11], %21 {strides = array<i32>} : memref<1x48xf32, #tpu.memory_space<vmem>>, vector<1x48xf32>,
    } else {
    }
    %c1_i32 = arith.constant 1 : i32
    %3 = arith.muli %arg0, %c1_i32 : i32
    %4 = arith.addi %3, %arg2 : i32
    %c4_i32 = arith.constant 4 : i32
    %5 = arith.muli %4, %c4_i32 : i32
    %6 = tpu.iota {dimensions = array<i32: 1>} : vector<1x4xi32>
    %7 = vector.broadcast %5 : i32 to vector<1x4xi32>
    %8 = arith.addi %6, %7 : vector<1x4xi32>
    %c4_i32_1 = arith.constant 4 : i32
    %9 = vector.broadcast %c4_i32_1 : i32 to vector<1x4xi32>
    %10 = arith.cmpi slt, %8, %9 : vector<1x4xi32>
    %11 = arith.extui %10 : vector<1x4xi1> to vector<1x4xi32>
    %12 = arith.sitofp %11 : vector<1x4xi32> to vector<1x4xf32>
    %c0 = arith.constant 0 : index
    %c0_2 = arith.constant 0 : index
    %13 = vector.load %arg5[%c0, %c0_2] : memref<1x48xf32, #tpu.memory_space<vmem>>, vector<1x48xf32>
    %c0_3 = arith.constant 0 : index
    %c0_4 = arith.constant 0 : index
    %14 = vector.load %arg3[%c0_3, %c0_4] : memref<4x48xf32, #tpu.memory_space<vmem>>, vector<4x48xf32>
    %cst = arith.constant dense<0.000000e+00> : vector<1x48xf32>
    %15 = tpu.matmul %12, %14, %cst {dimension_numbers = #tpu.dot_dimension_numbers<[1], [0], [0], [1], [0, 0, 1, 1], [], []>} : vector<1x4xf32>, vector<4x48xf32>, vector<1x48xf32> -> vector<1x48xf32>
    %16 = arith.addf %13, %15 : vector<1x48xf32>
    %c0_5 = arith.constant 0 : index
    %c0_6 = arith.constant 0 : index
    %17 = vector.load %arg5[%c0_5, %c0_6] : memref<1x48xf32, #tpu.memory_space<vmem>>, vector<1x48xf32>
    tpu.vector_store %arg5[%c0_5, %c0_6], %16 {strides = array<i32>} : memref<1x48xf32, #tpu.memory_space<vmem>>, vector<1x48xf32>,
    %c0_i32_7 = arith.constant 0 : i32
    %18 = arith.cmpi eq, %arg2, %c0_i32_7 : i32
    %19 = arith.extui %18 : i1 to i32
    %c0_i32_8 = arith.constant 0 : i32
    %20 = arith.cmpi ne, %19, %c0_i32_8 : i32
    scf.if %20 {
      %c0_9 = arith.constant 0 : index
      %c0_10 = arith.constant 0 : index
      %21 = vector.load %arg5[%c0_9, %c0_10] : memref<1x48xf32, #tpu.memory_space<vmem>>, vector<1x48xf32>
      %c0_11 = arith.constant 0 : index
      %c0_12 = arith.constant 0 : index
      %22 = vector.load %arg4[%c0_11, %c0_12] : memref<1x48xf32, #tpu.memory_space<vmem>>, vector<1x48xf32>
      tpu.vector_store %arg4[%c0_11, %c0_12], %21 {strides = array<i32>} : memref<1x48xf32, #tpu.memory_space<vmem>>, vector<1x48xf32>,
    } else {
    }
    return
  }
  func.func @transform_0(%arg0: i32, %arg1: i32, %arg2: i32) -> (i32, i32) {
    %c1_i32 = arith.constant 1 : i32
    %0 = arith.muli %arg0, %c1_i32 : i32
    %1 = arith.addi %0, %arg2 : i32
    %c0_i32 = arith.constant 0 : i32
    return %1, %arg1 : i32, i32
  }
  func.func @transform_1(%arg0: i32, %arg1: i32, %arg2: i32) -> (i32, i32) {
    %c1_i32 = arith.constant 1 : i32
    %0 = arith.muli %arg0, %c1_i32 : i32
    %1 = arith.addi %0, %arg1 : i32
    %c0_i32 = arith.constant 0 : i32
    %c0_i32_0 = arith.constant 0 : i32
    return %c0_i32, %1 : i32, i32
  }
}

</mosaic_0001>

<llo_original>
// kernel: tpu_custom_call.1
$region0: #{tpu_custom_call.1}
  #allocation0 [shape = 'u32[]', space=smem, size = 0x4, offset = 0x4, fixed_abs, tag = 'smem constant byte address 0x4 - core index']
  #allocation1 [shape = 'u32[144,128]{1,0:T(1,128)}', space=vmem, size = 0x12000, scoped, tag = 'internal scratch']
  #allocation2 [shape = 'f32[1,48]{1,0:T(1,128)}', space=vmem, size = 0x200, scoped, tag = 'scratch operand']
  %s0 = inlined_call_operand.hbm [shape: f32[4,48], index: 0, kind: input, shape index: {}]
  %s1 = inlined_call_operand.hbm [shape: f32[1,48], index: 1, kind: output, shape index: {}]
  %s2 = sld [smem:[#allocation0]]
  $region26: #{tpu_custom_call.1} parent=0
    _
  %s4 = ssub.s32 1, %s2
  %s5 = scalar_select 0, %s4, %s2
  $region1: #{tpu_custom_call.1} parent=0
    #allocation3 [shape = 'u8[2048]{0}', space=vmem, size = 0x800, scoped, tag = 'input window, operand 0, single buffered']
    #allocation4 [shape = 's32[1]{0}', space=sflag, size = 0x4, scoped, tag = 'scoped memory for tpu_custom_call.1']
    #allocation5 [shape = 's32[1]{0}', space=sflag, size = 0x4, scoped, tag = 'scoped memory for tpu_custom_call.1']
    #allocation6 [shape = 'u8[512]{0}', space=vmem, size = 0x400, scoped, tag = 'output window, operand 0, single buffered']
    %6 = vsyncpa [#allocation4], 0
    %7 = vsyncpa [#allocation5], 0
    // Predicated region
    $region2: #{tpu_custom_call.1} parent=1 // pred_check
      _
    $region3: #{tpu_custom_call.1} parent=1 // pred_check_branch
      %9 = sbr.rel (0) target = $region5
    $region4: #{tpu_custom_call.1} parent=1 // pred_region
      %s10 = sadd.s32 0, 0
      %s12 = ssub.s32 64, 64
      %13 = vsyncadd [#allocation4], %s12
      %s14 = smul.addr %s10, 64
      %s15 = scalar_lea.hbm %s0, %s14
      %s17 = sshll.u32 [#allocation3], 4
      %s18 = int_to_ptr.vmem [resolvable:$true] %s17
      %20 = dma.hbm_to_vmem [thread:$0]  %s15, 64, %s18, [#allocation4]
    $region5: #{tpu_custom_call.1} parent=1 // pred_fallthru
      _
    // Predicated region
    $region6: #{tpu_custom_call.1} parent=1 // pred_check
      _
    $region7: #{tpu_custom_call.1} parent=1 // pred_check_branch
      %22 = sbr.rel (0) target = $region9
    $region8: #{tpu_custom_call.1} parent=1 // pred_region
      %23 = dma.done [#allocation4], 64
    $region9: #{tpu_custom_call.1} parent=1 // pred_fallthru
      _
    %s24 = sadd.s32 0, 0
    %s25 = sadd.s32 0, 0
    %p26 = scmp.eq.s32.totalorder 0, 0
    // Predicated region
    $region10: #{tpu_custom_call.1} parent=1 // pred_check
      %p27 = pneg %p26
    $region11: #{tpu_custom_call.1} parent=1 // pred_check_branch
      %29 = sbr.rel (%p27) target = $region13
    $region12: #{tpu_custom_call.1} parent=1 // pred_region
      %vm30 = vcmask 385024
      %31 = vst.msk [vmem:[#allocation2] sm:$0x1] %vm30, 0.0
    $region13: #{tpu_custom_call.1} parent=1 // pred_fallthru
      _
    %s32 = sadd.s32 0, 0
    %s33 = smul.u32 %s32, 4
    %v34 = vlaneseq
    %v35 = vand.u32 %v34, 127
    %v36 = vstv %s33
    %v37 = vadd.s32 %v35, %v36
    %vm38 = vcmp.lt.s32.totalorder %v37, 4
    %v39 = vsel %vm38, 1, 0
    %v40 = vcvt.s32.f32 %v39
    %v41 = vld [vmem:[#allocation2] sm:$0x1]
    %v42 = vld [vmem:[#allocation3] sm:$0xf]
    %vm43 = vcmask 31744
    %v45 = vsel %vm43, %v40, 0
    %vm47 = vcmask 1043456
    %v49 = vsel %vm47, %v42, 0
    %51 = vmatprep.subr.mxu0 0.0
    %52 = vmatpush1.msra.mxu0 0.0
    %53 = vmatprep.subr.mxu0 0.0
    %54 = vmatpush1.msra.mxu0 0.0
    %55 = vmatprep.subr.mxu0 0.0
    %56 = vmatpush1.msra.mxu0 0.0
    %57 = vmatprep.subr.mxu0 0.0
    %58 = vmatpush1.msra.mxu0 0.0
    %59 = vmatprep.subr.mxu0 0.0
    %60 = vmatpush1.msra.mxu0 0.0
    %61 = vmatprep.subr.mxu0 0.0
    %62 = vmatpush1.msra.mxu0 0.0
    %63 = vmatprep.subr.mxu0 0.0
    %64 = vmatpush1.msra.mxu0 0.0
    %65 = vmatprep.subr.mxu0 0.0
    %66 = vmatpush1.msra.mxu0 0.0
    %67 = vmatprep.subr.mxu0 0.0
    %68 = vmatpush1.msra.mxu0 0.0
    %69 = vmatprep.subr.mxu0 0.0
    %70 = vmatpush1.msra.mxu0 0.0
    %71 = vmatprep.subr.mxu0 0.0
    %72 = vmatpush1.msra.mxu0 0.0
    %73 = vmatprep.subr.mxu0 0.0
    %74 = vmatpush1.msra.mxu0 0.0
    %75 = vmatprep.subr.mxu0 0.0
    %76 = vmatpush1.msra.mxu0 0.0
    %77 = vmatprep.subr.mxu0 0.0
    %78 = vmatpush1.msra.mxu0 0.0
    %79 = vmatprep.subr.mxu0 0.0
    %80 = vmatpush1.msra.mxu0 0.0
    %81 = vmatprep.subr.mxu0 0.0
    %82 = vmatpush1.msra.mxu0 %v49
    %83 = vmatprep.subr.mxu0 0.0
    %84 = vmatpush2.msra.mxu0 0.0
    %85 = vmatprep.subr.mxu0 0.0
    %86 = vmatpush2.msra.mxu0 0.0
    %87 = vmatprep.subr.mxu0 0.0
    %88 = vmatpush2.msra.mxu0 0.0
    %89 = vmatprep.subr.mxu0 0.0
    %90 = vmatpush2.msra.mxu0 0.0
    %91 = vmatprep.subr.mxu0 0.0
    %92 = vmatpush2.msra.mxu0 0.0
    %93 = vmatprep.subr.mxu0 0.0
    %94 = vmatpush2.msra.mxu0 0.0
    %95 = vmatprep.subr.mxu0 0.0
    %96 = vmatpush2.msra.mxu0 0.0
    %97 = vmatprep.subr.mxu0 0.0
    %98 = vmatpush2.msra.mxu0 0.0
    %99 = vmatprep.subr.mxu0 0.0
    %100 = vmatpush2.msra.mxu0 0.0
    %101 = vmatprep.subr.mxu0 0.0
    %102 = vmatpush2.msra.mxu0 0.0
    %103 = vmatprep.subr.mxu0 0.0
    %104 = vmatpush2.msra.mxu0 0.0
    %105 = vmatprep.subr.mxu0 0.0
    %106 = vmatpush2.msra.mxu0 0.0
    %107 = vmatprep.subr.mxu0 0.0
    %108 = vmatpush2.msra.mxu0 0.0
    %109 = vmatprep.subr.mxu0 0.0
    %110 = vmatpush2.msra.mxu0 0.0
    %111 = vmatprep.subr.mxu0 0.0
    %112 = vmatpush2.msra.mxu0 0.0
    %113 = vmatprep.subr.mxu0 0.0
    %114 = vmatpush2.msra.mxu0 0.0
    %115 = vmatprep.mubr.f32.mxu0 0.0
    %116 = vmatmul.mubr.f32.gmra.mxu0 %v45
    %v117 = vpop.f32.mrf.mxu0
    %v118 = vadd.f32 0.0, %v117
    %v119 = vpop.f32.mrf.mxu0
    %120 = vdwg.mxu0
    %v121 = vadd.f32 %v41, %v118
    %vm122 = vcmask 385024
    %123 = vst.msk [vmem:[#allocation2] sm:$0x1] %vm122, %v121
    // Predicated region
    $region14: #{tpu_custom_call.1} parent=1 // pred_check
      %p124 = pneg %p26
    $region15: #{tpu_custom_call.1} parent=1 // pred_check_branch
      %126 = sbr.rel (%p124) target = $region17
    $region16: #{tpu_custom_call.1} parent=1 // pred_region
      %v127 = vld [vmem:[#allocation2] sm:$0x1]
      %128 = vst.msk [vmem:[#allocation6] sm:$0x1] %vm122, %v127
    $region17: #{tpu_custom_call.1} parent=1 // pred_fallthru
      _
    // Predicated region
    $region18: #{tpu_custom_call.1} parent=1 // pred_check
      _
    $region19: #{tpu_custom_call.1} parent=1 // pred_check_branch
      %130 = sbr.rel (0) target = $region21
    $region20: #{tpu_custom_call.1} parent=1 // pred_region
      %s131 = sadd.s32 0, 0
      %s133 = ssub.s32 16, 16
      %134 = vsyncadd [#allocation5], %s133
      %s135 = smul.addr %s131, 16
      %s136 = scalar_lea.hbm %s1, %s135
      %s138 = sshll.u32 [#allocation6], 4
      %s139 = int_to_ptr.vmem [resolvable:$true] %s138
      %141 = dma.vmem_to_hbm [thread:$0]  %s139, 16, %s136, [#allocation5]
    $region21: #{tpu_custom_call.1} parent=1 // pred_fallthru
      _
    // Predicated region
    $region22: #{tpu_custom_call.1} parent=1 // pred_check
      _
    $region23: #{tpu_custom_call.1} parent=1 // pred_check_branch
      %143 = sbr.rel (0) target = $region25
    $region24: #{tpu_custom_call.1} parent=1 // pred_region
      %144 = dma.done [#allocation5], 16
    $region25: #{tpu_custom_call.1} parent=1 // pred_fallthru
      _
    %145 = vsyncpa [#allocation4], 1
    %146 = vsyncpa [#allocation5], 1

</llo_original>
